<compile_context>
chip_gen: v7x
topology: tpu7x:2x2x1
jax: 0.10.0
libtpu: 0.0.40
codegen_flags: <defaults>
</compile_context>

<pallas_src>
import functools

import jax
import jax.numpy as jnp
from jax.experimental import pallas as pl
from jax.experimental.pallas import tpu as pltpu

LANE = 128          # lane-dense width for hidden layers / output slab
MAX_TILE = 4096     # batch tile cap (multiple of 8); ~4.5 MiB double-buffered, far < VMEM
_DIMS = [(4, 10), (10, 20), (20, 10), (10, 3)]   # nn.Linear (fan_in, fan_out) per layer


def _round_up(n, m):
    return ((n + m - 1) // m) * m


def _mlp_kernel(x_ref, w_ref, b_ref, o_ref):
    # x_ref: (TB, 4)   w_ref: (4, 128, 128) packed weight slab   b_ref: (4, 128) biases
    x = x_ref[...]                              # (TB, 4)

    # ---- Layer 1: K=4 contraction as 4 VPU broadcast-FMAs (skip the MXU for a 4-deep K,
    #      avoiding a weight-load/drain and the awkward (TB,4) MXU operand layout).
    w1 = w_ref[0, 0:4, :]                       # (4, 128) static slice of the slab
    h = b_ref[0:1, :] + x[:, 0:1] * w1[0:1, :]
    h = h + x[:, 1:2] * w1[1:2, :]
    h = h + x[:, 2:3] * w1[2:3, :]
    h = h + x[:, 3:4] * w1[3:4, :]
    h = jnp.maximum(h, 0.0)                     # (TB, 128)

    # ---- Layers 2-4 on the MXU with the resident 128x128 padded weights.
    h = jnp.maximum(jnp.dot(h, w_ref[1], preferred_element_type=jnp.float32)
                    + b_ref[1:2, :], 0.0)
    h = jnp.maximum(jnp.dot(h, w_ref[2], preferred_element_type=jnp.float32)
                    + b_ref[2:3, :], 0.0)
    out = jnp.dot(h, w_ref[3], preferred_element_type=jnp.float32) + b_ref[3:4, :]

    o_ref[...] = out.astype(o_ref.dtype)        # (TB, 128) lane-dense, unmasked store


def init_params(key):
    """Deterministic synthetic init matching nn.Linear (uniform +/- 1/sqrt(fan_in)).
    Weights stored as (in, out) so the kernel computes x @ W + b (== torch x @ W.T + b)."""
    params = {}
    for i, (fan_in, fan_out) in enumerate(_DIMS, start=1):
        key, kw, kb = jax.random.split(key, 3)
        bound = 1.0 / jnp.sqrt(float(fan_in))
        params[f"w{i}"] = jax.random.uniform(
            kw, (fan_in, fan_out), jnp.float32, -bound, bound)
        params[f"b{i}"] = jax.random.uniform(
            kb, (fan_out,), jnp.float32, -bound, bound)
    return params


def pack_params(params):
    """Pack all layers into a single (4,128,128) weight slab + (4,128) bias slab.
    Zero padding of the unused rows/cols keeps the math exact through bias-add + ReLU."""
    w_slab = jnp.zeros((4, LANE, LANE), jnp.float32)
    b_slab = jnp.zeros((4, LANE), jnp.float32)
    for i, (fan_in, fan_out) in enumerate(_DIMS):
        w_slab = w_slab.at[i, :fan_in, :fan_out].set(params[f"w{i+1}"])
        b_slab = b_slab.at[i, :fan_out].set(params[f"b{i+1}"])
    return w_slab, b_slab


@functools.partial(jax.jit, static_argnames=("num_class",))
def iris_classifier_forward(x, w_slab, b_slab, num_class=3):
    """x: (B, 4) float32.  Entire forward (pad + kernel + slice) fuses into one dispatch."""
    B, F = x.shape

    # Tile policy: round B to 8 first, then split into >=2 tiles (engages both v7x TCs;
    # inert and harmless on single-TC v5e/v6e), tile a multiple of 8, capped at MAX_TILE.
    B8 = _round_up(B, 8)
    n_tiles = 1 if B8 <= 8 else max(2, pl.cdiv(B8, MAX_TILE))
    TB = _round_up(pl.cdiv(B8, n_tiles), 8)
    B_pad = n_tiles * TB
    if B_pad != B:
        x = jnp.pad(x, ((0, B_pad - B), (0, 0)))

    flops = 2 * B_pad * (F * LANE + 3 * LANE * LANE)
    bytes_accessed = 4 * (B_pad * F + B_pad * LANE
                          + int(w_slab.size) + int(b_slab.size))

    out = pl.pallas_call(
        _mlp_kernel,
        out_shape=jax.ShapeDtypeStruct((B_pad, LANE), jnp.float32),
        grid=(n_tiles,),
        in_specs=[
            pl.BlockSpec((TB, F), lambda i: (i, 0)),            # batch tile of x
            pl.BlockSpec(w_slab.shape, lambda i: (0, 0, 0)),    # resident weight slab
            pl.BlockSpec(b_slab.shape, lambda i: (0, 0)),       # resident bias slab
        ],
        out_specs=pl.BlockSpec((TB, LANE), lambda i: (i, 0)),   # lane-dense output slab
        compiler_params=pltpu.CompilerParams(
            dimension_semantics=("parallel",)),
        cost_estimate=pl.CostEstimate(
            flops=flops, transcendentals=0, bytes_accessed=bytes_accessed),
    )(x, w_slab, b_slab)

    # Slice stays fused inside this jit (never a standalone dispatch).
    return out[:B, :num_class]


def reference_forward(x, params):
    h = jnp.maximum(x @ params["w1"] + params["b1"], 0.0)
    h = jnp.maximum(h @ params["w2"] + params["b2"], 0.0)
    h = jnp.maximum(h @ params["w3"] + params["b3"], 0.0)
    return h @ params["w4"] + params["b4"]


if __name__ == "__main__":
    key = jax.random.PRNGKey(0)
    kx, kp = jax.random.split(key)

    # Whole Iris-dataset-sized batch per call (still tiny); splits into 2 grid tiles.
    batch = 150
    x = jax.random.normal(kx, (batch, 4), jnp.float32)

    params = init_params(kp)            # raw nn.Linear-shaped params
    w_slab, b_slab = pack_params(params)  # packed/padded once, reused every call

    out = iris_classifier_forward(x, w_slab, b_slab, num_class=3)
    out = jax.block_until_ready(out)

    ref = reference_forward(x, params)
    assert out.shape == (batch, 3), out.shape
    assert jnp.allclose(out, ref, atol=1e-4, rtol=1e-4), "mismatch vs reference"

    print("KERNEL_OK")
</pallas_src>

<mosaic_0001>
module attributes {stable_mosaic.version = 11 : i64} {
  func.func @_mlp_kernel(%arg0: i32, %arg1: memref<80x4xf32, #tpu.memory_space<vmem>>, %arg2: memref<4x128x128xf32, #tpu.memory_space<vmem>>, %arg3: memref<4x128xf32, #tpu.memory_space<vmem>>, %arg4: memref<80x128xf32, #tpu.memory_space<vmem>>) attributes {dimension_semantics = [#tpu.dimension_semantics<parallel>], iteration_bounds = array<i64: 2>, scalar_prefetch = 0 : i64, scratch_operands = 0 : i64, tpu.core_type = #tpu.core_type<tc>, window_params = [{transform_indices = @transform_0, window_bounds = array<i64: 80, 4>}, {pipeline_mode = #tpu.pipeline_mode<synchronous>, transform_indices = @transform_1, window_bounds = array<i64: 4, 128, 128>}, {pipeline_mode = #tpu.pipeline_mode<synchronous>, transform_indices = @transform_2, window_bounds = array<i64: 4, 128>}, {transform_indices = @transform_3, window_bounds = array<i64: 80, 128>}]} {
    %c0 = arith.constant 0 : index
    %c0_0 = arith.constant 0 : index
    %0 = vector.load %arg1[%c0, %c0_0] : memref<80x4xf32, #tpu.memory_space<vmem>>, vector<80x4xf32>
    %c0_1 = arith.constant 0 : index
    %c0_2 = arith.constant 0 : index
    %c0_3 = arith.constant 0 : index
    %1 = vector.load %arg2[%c0_1, %c0_2, %c0_3] : memref<4x128x128xf32, #tpu.memory_space<vmem>>, vector<1x4x128xf32>
    %2 = vector.shape_cast %1 : vector<1x4x128xf32> to vector<4x128xf32>
    %c0_4 = arith.constant 0 : index
    %c0_5 = arith.constant 0 : index
    %3 = vector.load %arg3[%c0_4, %c0_5] : memref<4x128xf32, #tpu.memory_space<vmem>>, vector<1x128xf32>
    %4 = vector.extract_strided_slice %0 {offsets = [0, 0], sizes = [80, 1], strides = [1, 1]} : vector<80x4xf32> to vector<80x1xf32>
    %5 = vector.extract_strided_slice %2 {offsets = [0, 0], sizes = [1, 128], strides = [1, 1]} : vector<4x128xf32> to vector<1x128xf32>
    %6 = vector.broadcast %4 : vector<80x1xf32> to vector<80x128xf32>
    %7 = vector.broadcast %5 : vector<1x128xf32> to vector<80x128xf32>
    %8 = arith.mulf %6, %7 : vector<80x128xf32>
    %9 = vector.broadcast %3 : vector<1x128xf32> to vector<80x128xf32>
    %10 = arith.addf %9, %8 : vector<80x128xf32>
    %11 = vector.extract_strided_slice %0 {offsets = [0, 1], sizes = [80, 1], strides = [1, 1]} : vector<80x4xf32> to vector<80x1xf32>
    %12 = vector.extract_strided_slice %2 {offsets = [1, 0], sizes = [1, 128], strides = [1, 1]} : vector<4x128xf32> to vector<1x128xf32>
    %13 = vector.broadcast %11 : vector<80x1xf32> to vector<80x128xf32>
    %14 = vector.broadcast %12 : vector<1x128xf32> to vector<80x128xf32>
    %15 = arith.mulf %13, %14 : vector<80x128xf32>
    %16 = arith.addf %10, %15 : vector<80x128xf32>
    %17 = vector.extract_strided_slice %0 {offsets = [0, 2], sizes = [80, 1], strides = [1, 1]} : vector<80x4xf32> to vector<80x1xf32>
    %18 = vector.extract_strided_slice %2 {offsets = [2, 0], sizes = [1, 128], strides = [1, 1]} : vector<4x128xf32> to vector<1x128xf32>
    %19 = vector.broadcast %17 : vector<80x1xf32> to vector<80x128xf32>
    %20 = vector.broadcast %18 : vector<1x128xf32> to vector<80x128xf32>
    %21 = arith.mulf %19, %20 : vector<80x128xf32>
    %22 = arith.addf %16, %21 : vector<80x128xf32>
    %23 = vector.extract_strided_slice %0 {offsets = [0, 3], sizes = [80, 1], strides = [1, 1]} : vector<80x4xf32> to vector<80x1xf32>
    %24 = vector.extract_strided_slice %2 {offsets = [3, 0], sizes = [1, 128], strides = [1, 1]} : vector<4x128xf32> to vector<1x128xf32>
    %25 = vector.broadcast %23 : vector<80x1xf32> to vector<80x128xf32>
    %26 = vector.broadcast %24 : vector<1x128xf32> to vector<80x128xf32>
    %27 = arith.mulf %25, %26 : vector<80x128xf32>
    %28 = arith.addf %22, %27 : vector<80x128xf32>
    %cst = arith.constant 0.000000e+00 : f32
    %29 = vector.broadcast %cst : f32 to vector<80x128xf32>
    %30 = arith.maximumf %28, %29 : vector<80x128xf32>
    %c1 = arith.constant 1 : index
    %c0_6 = arith.constant 0 : index
    %c0_7 = arith.constant 0 : index
    %31 = vector.load %arg2[%c1, %c0_6, %c0_7] : memref<4x128x128xf32, #tpu.memory_space<vmem>>, vector<1x128x128xf32>
    %32 = vector.shape_cast %31 : vector<1x128x128xf32> to vector<128x128xf32>
    %cst_8 = arith.constant dense<0.000000e+00> : vector<80x128xf32>
    %33 = tpu.matmul %30, %32, %cst_8 {dimension_numbers = #tpu.dot_dimension_numbers<[1], [0], [0], [1], [0, 0, 1, 1], [], []>} : vector<80x128xf32>, vector<128x128xf32>, vector<80x128xf32> -> vector<80x128xf32>
    %c1_9 = arith.constant 1 : index
    %c0_10 = arith.constant 0 : index
    %34 = vector.load %arg3[%c1_9, %c0_10] : memref<4x128xf32, #tpu.memory_space<vmem>>, vector<1x128xf32>
    %35 = vector.broadcast %34 : vector<1x128xf32> to vector<80x128xf32>
    %36 = arith.addf %33, %35 : vector<80x128xf32>
    %cst_11 = arith.constant 0.000000e+00 : f32
    %37 = vector.broadcast %cst_11 : f32 to vector<80x128xf32>
    %38 = arith.maximumf %36, %37 : vector<80x128xf32>
    %c2 = arith.constant 2 : index
    %c0_12 = arith.constant 0 : index
    %c0_13 = arith.constant 0 : index
    %39 = vector.load %arg2[%c2, %c0_12, %c0_13] : memref<4x128x128xf32, #tpu.memory_space<vmem>>, vector<1x128x128xf32>
    %40 = vector.shape_cast %39 : vector<1x128x128xf32> to vector<128x128xf32>
    %cst_14 = arith.constant dense<0.000000e+00> : vector<80x128xf32>
    %41 = tpu.matmul %38, %40, %cst_14 {dimension_numbers = #tpu.dot_dimension_numbers<[1], [0], [0], [1], [0, 0, 1, 1], [], []>} : vector<80x128xf32>, vector<128x128xf32>, vector<80x128xf32> -> vector<80x128xf32>
    %c2_15 = arith.constant 2 : index
    %c0_16 = arith.constant 0 : index
    %42 = vector.load %arg3[%c2_15, %c0_16] : memref<4x128xf32, #tpu.memory_space<vmem>>, vector<1x128xf32>
    %43 = vector.broadcast %42 : vector<1x128xf32> to vector<80x128xf32>
    %44 = arith.addf %41, %43 : vector<80x128xf32>
    %cst_17 = arith.constant 0.000000e+00 : f32
    %45 = vector.broadcast %cst_17 : f32 to vector<80x128xf32>
    %46 = arith.maximumf %44, %45 : vector<80x128xf32>
    %c3 = arith.constant 3 : index
    %c0_18 = arith.constant 0 : index
    %c0_19 = arith.constant 0 : index
    %47 = vector.load %arg2[%c3, %c0_18, %c0_19] : memref<4x128x128xf32, #tpu.memory_space<vmem>>, vector<1x128x128xf32>
    %48 = vector.shape_cast %47 : vector<1x128x128xf32> to vector<128x128xf32>
    %cst_20 = arith.constant dense<0.000000e+00> : vector<80x128xf32>
    %49 = tpu.matmul %46, %48, %cst_20 {dimension_numbers = #tpu.dot_dimension_numbers<[1], [0], [0], [1], [0, 0, 1, 1], [], []>} : vector<80x128xf32>, vector<128x128xf32>, vector<80x128xf32> -> vector<80x128xf32>
    %c3_21 = arith.constant 3 : index
    %c0_22 = arith.constant 0 : index
    %50 = vector.load %arg3[%c3_21, %c0_22] : memref<4x128xf32, #tpu.memory_space<vmem>>, vector<1x128xf32>
    %51 = vector.broadcast %50 : vector<1x128xf32> to vector<80x128xf32>
    %52 = arith.addf %49, %51 : vector<80x128xf32>
    %c0_23 = arith.constant 0 : index
    %c0_24 = arith.constant 0 : index
    %53 = vector.load %arg4[%c0_23, %c0_24] : memref<80x128xf32, #tpu.memory_space<vmem>>, vector<80x128xf32>
    tpu.vector_store %arg4[%c0_23, %c0_24], %52 {strides = array<i32>} : memref<80x128xf32, #tpu.memory_space<vmem>>, vector<80x128xf32>,
    return
  }
  func.func @transform_0(%arg0: i32) -> (i32, i32) {
    %c0_i32 = arith.constant 0 : i32
    %c0_i32_0 = arith.constant 0 : i32
    return %arg0, %c0_i32 : i32, i32
  }
  func.func @transform_1(%arg0: i32) -> (i32, i32, i32) {
    %c0_i32 = arith.constant 0 : i32
    %c0_i32_0 = arith.constant 0 : i32
    %c0_i32_1 = arith.constant 0 : i32
    %c0_i32_2 = arith.constant 0 : i32
    return %c0_i32, %c0_i32_0, %c0_i32_1 : i32, i32, i32
  }
  func.func @transform_2(%arg0: i32) -> (i32, i32) {
    %c0_i32 = arith.constant 0 : i32
    %c0_i32_0 = arith.constant 0 : i32
    %c0_i32_1 = arith.constant 0 : i32
    return %c0_i32, %c0_i32_0 : i32, i32
  }
  func.func @transform_3(%arg0: i32) -> (i32, i32) {
    %c0_i32 = arith.constant 0 : i32
    %c0_i32_0 = arith.constant 0 : i32
    return %arg0, %c0_i32 : i32, i32
  }
}

</mosaic_0001>

<llo_original>
// kernel: iris_classifier_forward.1
$region0: #{iris_classifier_forward.1}
  #allocation0 [shape = 'u32[]', space=smem, size = 0x4, offset = 0x4, fixed_abs, tag = 'smem constant byte address 0x4 - core index']
  #allocation1 [shape = 'u32[144,128]{1,0:T(1,128)}', space=vmem, size = 0x12000, scoped, tag = 'internal scratch']
  %s0 = inlined_call_operand.vmem [shape: f32[160,4], index: 0, kind: input, shape index: {}]
  %s1 = inlined_call_operand.hbm [shape: f32[4,128,128], index: 1, kind: input, shape index: {}]
  %s2 = inlined_call_operand.vmem [shape: f32[4,128], index: 2, kind: input, shape index: {}]
  %s3 = inlined_call_operand.vmem [shape: f32[160,128], index: 3, kind: output, shape index: {}]
  %s4 = sld [smem:[#allocation0]]
  $region49: #{iris_classifier_forward.1} parent=0
    _
  %s6 = ssub.s32 1, %s4
  %s7 = scalar_select 0, %s6, %s4
  $region1: #{iris_classifier_forward.1} parent=0
    #allocation2 [shape = 'u8[262144]{0}', space=vmem, size = 0x40000, scoped, tag = 'input window, operand 1, single buffered']
    #allocation3 [shape = 's32[2]{0}', space=sflag, size = 0x8, scoped, tag = 'scoped memory for iris_classifier_forward.1']
    %8 = vsyncpa [#allocation3], 0
    loop: start=0, step=1, limit=4
    $region2: #{iris_classifier_forward.1} parent=1 // loop_pre_header
      _
    $region3: #{iris_classifier_forward.1} parent=1 // loop_header
      %s10 = sphi 0, %s14
      %p11 = scmp.ge.s32.totalorder %s10, 4
      %s20 = sphi 0, %s22
      %s23 = sphi 0, %s20
      %s24 = sphi 0, %s23
      %s40 = sphi 0, %s24
      %s44 = sphi 0, %s44
      %s46 = sphi 0, %s44
      %s47 = sphi 0, %s46
      %s61 = sphi 0, %s47
      %s65 = sphi 0, %s65
      %s67 = sphi 0, %s65
      %s68 = sphi 0, %s67
      %s82 = sphi 0, %s68
      %s88 = sphi 0, %s90
      %s91 = sphi 0, %s88
      %s92 = sphi 0, %s91
      %s108 = sphi 0, %s92
    $region4: #{iris_classifier_forward.1} parent=1 // loop_header_branch
      %13 = sbr.rel (%p11) target = $region8
    $region5: #{iris_classifier_forward.1} parent=1 // loop_body
      %s15 = ssub.s32 %s10, 1
      %s16 = ssub.s32 %s10, 2
      %s17 = sadd.s32 %s10, 1
      %s18 = ssub.s32 %s10, %s17
      %p19 = scmp.eq.s32.totalorder %s18, 0
      %s21 = sadd.s32 %s20, 1
      %s22 = scalar_select %p19, %s20, %s21
      %p25 = pneg %p19
      %p26 = scmp.eq.s32.totalorder %s10, 1
      %p27 = por %p25, %p26
      %p28 = scmp.ne.s32.totalorder %s20, %s23
      %p29 = scmp.eq.s32.totalorder %s10, 0
      %p30 = por %p28, %p29
      %p31 = scmp.ne.s32.totalorder %s20, %s23
      %p32 = scmp.eq.s32.totalorder %s15, 1
      %p33 = por %p31, %p32
      %p34 = scmp.ne.s32.totalorder %s23, %s24
      %p35 = scmp.eq.s32.totalorder %s15, 0
      %p36 = por %p34, %p35
      %p37 = scmp.ne.s32.totalorder %s23, %s24
      %p38 = scmp.eq.s32.totalorder %s16, 1
      %p39 = por %p37, %p38
      %p41 = scmp.ne.s32.totalorder %s24, %s40
      %p42 = scmp.eq.s32.totalorder %s16, 0
      %p43 = por %p41, %p42
      %s45 = sadd.s32 %s44, 1
      %p48 = scmp.eq.s32.totalorder %s10, 1
      %p49 = scmp.ne.s32.totalorder %s44, %s46
      %p50 = scmp.eq.s32.totalorder %s10, 0
      %p51 = por %p49, %p50
      %p52 = scmp.ne.s32.totalorder %s44, %s46
      %p53 = scmp.eq.s32.totalorder %s15, 1
      %p54 = por %p52, %p53
      %p55 = scmp.ne.s32.totalorder %s46, %s47
      %p56 = scmp.eq.s32.totalorder %s15, 0
      %p57 = por %p55, %p56
      %p58 = scmp.ne.s32.totalorder %s46, %s47
      %p59 = scmp.eq.s32.totalorder %s16, 1
      %p60 = por %p58, %p59
      %p62 = scmp.ne.s32.totalorder %s47, %s61
      %p63 = scmp.eq.s32.totalorder %s16, 0
      %p64 = por %p62, %p63
      %s66 = sadd.s32 %s65, 1
      %p69 = scmp.eq.s32.totalorder %s10, 1
      %p70 = scmp.ne.s32.totalorder %s65, %s67
      %p71 = scmp.eq.s32.totalorder %s10, 0
      %p72 = por %p70, %p71
      %p73 = scmp.ne.s32.totalorder %s65, %s67
      %p74 = scmp.eq.s32.totalorder %s15, 1
      %p75 = por %p73, %p74
      %p76 = scmp.ne.s32.totalorder %s67, %s68
      %p77 = scmp.eq.s32.totalorder %s15, 0
      %p78 = por %p76, %p77
      %p79 = scmp.ne.s32.totalorder %s67, %s68
      %p80 = scmp.eq.s32.totalorder %s16, 1
      %p81 = por %p79, %p80
      %p83 = scmp.ne.s32.totalorder %s68, %s82
      %p84 = scmp.eq.s32.totalorder %s16, 0
      %p85 = por %p83, %p84
      %s86 = ssub.s32 %s10, %s17
      %p87 = scmp.eq.s32.totalorder %s86, 0
      %s89 = sadd.s32 %s88, 1
      %s90 = scalar_select %p87, %s88, %s89
      %p93 = pneg %p87
      %p94 = scmp.eq.s32.totalorder %s10, 1
      %p95 = por %p93, %p94
      %p96 = scmp.ne.s32.totalorder %s88, %s91
      %p97 = scmp.eq.s32.totalorder %s10, 0
      %p98 = por %p96, %p97
      %p99 = scmp.ne.s32.totalorder %s88, %s91
      %p100 = scmp.eq.s32.totalorder %s15, 1
      %p101 = por %p99, %p100
      %p102 = scmp.ne.s32.totalorder %s91, %s92
      %p103 = scmp.eq.s32.totalorder %s15, 0
      %p104 = por %p102, %p103
      %p105 = scmp.ne.s32.totalorder %s91, %s92
      %p106 = scmp.eq.s32.totalorder %s16, 1
      %p107 = por %p105, %p106
      %p109 = scmp.ne.s32.totalorder %s92, %s108
      %p110 = scmp.eq.s32.totalorder %s16, 0
      %p111 = por %p109, %p110
      %p112 = scmp.le.s32.totalorder 1, %s10
      %p113 = scmp.lt.s32.totalorder %s10, 3
      %p114 = pnand %p112, %p113
      %p115 = pneg %p114
      // Predicated region
      $region9: #{iris_classifier_forward.1} parent=5 // pred_check
        _
      $region10: #{iris_classifier_forward.1} parent=5 // pred_check_branch
        %117 = sbr.rel (%p114) target = $region12
      $region11: #{iris_classifier_forward.1} parent=5 // pred_region
        %s118 = ssub.s32 %s10, 1
        // Predicated region
        $region13: #{iris_classifier_forward.1} parent=11 // pred_check
          %p119 = pneg %p57
        $region14: #{iris_classifier_forward.1} parent=11 // pred_check_branch
          %121 = sbr.rel (%p119) target = $region16
        $region15: #{iris_classifier_forward.1} parent=11 // pred_region
          %s123 = ssub.s32 8192, 8192
          %124 = vsyncadd [#allocation3], %s123
          %s125 = sshll.u32 [#allocation2], 4
          %s126 = int_to_ptr.vmem [resolvable:$true] %s125
          %131 = dma.hbm_to_vmem [thread:$0]  %s1, 8192, %s126, [#allocation3], 128, 128, 8
        $region16: #{iris_classifier_forward.1} parent=11 // pred_fallthru
          _
        // Predicated region
        $region17: #{iris_classifier_forward.1} parent=11 // pred_check
          %p132 = pneg %p78
        $region18: #{iris_classifier_forward.1} parent=11 // pred_check_branch
          %134 = sbr.rel (%p132) target = $region20
        $region19: #{iris_classifier_forward.1} parent=11 // pred_region
          _
        $region20: #{iris_classifier_forward.1} parent=11 // pred_fallthru
          _
      $region12: #{iris_classifier_forward.1} parent=5 // pred_fallthru
        _
      %p135 = scmp.lt.s32.totalorder %s10, 2
      // Predicated region
      $region21: #{iris_classifier_forward.1} parent=5 // pred_check
        %p136 = pneg %p135
      $region22: #{iris_classifier_forward.1} parent=5 // pred_check_branch
        %138 = sbr.rel (%p136) target = $region24
      $region23: #{iris_classifier_forward.1} parent=5 // pred_region
        // Predicated region
        $region25: #{iris_classifier_forward.1} parent=23 // pred_check
          %p139 = pneg %p30
        $region26: #{iris_classifier_forward.1} parent=23 // pred_check_branch
          %141 = sbr.rel (%p139) target = $region28
        $region27: #{iris_classifier_forward.1} parent=23 // pred_region
          %s142 = smul.u32 10, %s10
          %p143 = scmp.lt.s32.totalorder %s142, 19
          %s144 = scalar_select %p143, %s142, 19
          %s145 = smul.addr %s144, 8
          %s146 = scalar_lea.vmem %s0, %s145
          %s147 = smul.u32 10, %s10
        $region28: #{iris_classifier_forward.1} parent=23 // pred_fallthru
          _
      $region24: #{iris_classifier_forward.1} parent=5 // pred_fallthru
        _
      %p148 = scmp.le.s32.totalorder 1, %s10
      %p149 = scmp.lt.s32.totalorder %s10, 3
      %p150 = pnand %p148, %p149
      %p151 = pneg %p150
      // Predicated region
      $region29: #{iris_classifier_forward.1} parent=5 // pred_check
        _
      $region30: #{iris_classifier_forward.1} parent=5 // pred_check_branch
        %153 = sbr.rel (%p150) target = $region32
      $region31: #{iris_classifier_forward.1} parent=5 // pred_region
        %s154 = ssub.s32 %s10, 1
        // Predicated region
        $region33: #{iris_classifier_forward.1} parent=31 // pred_check
          %p155 = pneg %p57
        $region34: #{iris_classifier_forward.1} parent=31 // pred_check_branch
          %157 = sbr.rel (%p155) target = $region36
        $region35: #{iris_classifier_forward.1} parent=31 // pred_region
          %158 = dma.done [#allocation3], 8192
        $region36: #{iris_classifier_forward.1} parent=31 // pred_fallthru
          _
        %s159 = smul.u32 10, %s15
        %p160 = scmp.lt.s32.totalorder %s159, 19
        %s161 = scalar_select %p160, %s159, 19
        %s162 = smul.addr %s161, 8
        %s163 = scalar_lea.vmem %s0, %s162
        %p164 = pneg %p36
        %p165 = pneg %p33
        %p166 = pneg %p57
        %p167 = pneg %p54
        %p168 = pneg %p78
        %p169 = pneg %p75
        %p170 = pneg %p104
        %p171 = pneg %p101
        %s172 = smul.u32 10, %s15
        %p173 = scmp.lt.s32.totalorder %s172, 19
        %s174 = scalar_select %p173, %s172, 19
        %s175 = smul.addr %s174, 8
        %s176 = scalar_lea.vmem %s3, %s175
        %s177 = smul.u32 10, %s15
        %p178 = scmp.lt.s32.totalorder %s177, 19
        %s179 = scalar_select %p178, %s177, 19
        %s180 = smul.addr %s179, 8
        %s181 = scalar_lea.vmem %s0, %s180
        %s182 = smul.u32 10, %s15
        %s183 = smul.u32 10, %s15
        %p184 = scmp.lt.s32.totalorder %s183, 19
        %s185 = scalar_select %p184, %s183, 19
        %s186 = smul.addr %s185, 8
        %s187 = scalar_lea.vmem %s3, %s186
        %s188 = smul.u32 10, %s15
        %v189 = vld [vmem:[%s181] sm:$0xff]
        %v190 = vld [vmem:[%s181 + $0x8] sm:$0xff]
        %v191 = vld [vmem:[%s181 + $0x10] sm:$0xff]
        %v192 = vld [vmem:[%s181 + $0x18] sm:$0xff]
        %v193 = vld [vmem:[%s181 + $0x20] sm:$0xff]
        %v194 = vld [vmem:[%s181 + $0x28] sm:$0xff]
        %v195 = vld [vmem:[%s181 + $0x30] sm:$0xff]
        %v196 = vld [vmem:[%s181 + $0x38] sm:$0xff]
        %v197 = vld [vmem:[%s181 + $0x40] sm:$0xff]
        %v198 = vld [vmem:[%s181 + $0x48] sm:$0xff]
        %v199 = vld [vmem:[#allocation2] sm:$0xf]
        %v200 = vld [vmem:[%s2] sm:$0x1]
        %202 = vset.pattern.permute.xlu0 0
        %203 = vperm.xlu0 %202, %v189
        %v204 = vpop.permute.xlu0 %203
        %207 = vset.pattern.permute.xlu0 0
        %208 = vperm.xlu0 %207, %v190
        %v209 = vpop.permute.xlu0 %208
        %212 = vset.pattern.permute.xlu0 0
        %213 = vperm.xlu0 %212, %v191
        %v214 = vpop.permute.xlu0 %213
        %217 = vset.pattern.permute.xlu0 0
        %218 = vperm.xlu0 %217, %v192
        %v219 = vpop.permute.xlu0 %218
        %222 = vset.pattern.permute.xlu0 0
        %223 = vperm.xlu0 %222, %v193
        %v224 = vpop.permute.xlu0 %223
        %227 = vset.pattern.permute.xlu0 0
        %228 = vperm.xlu0 %227, %v194
        %v229 = vpop.permute.xlu0 %228
        %232 = vset.pattern.permute.xlu0 0
        %233 = vperm.xlu0 %232, %v195
        %v234 = vpop.permute.xlu0 %233
        %237 = vset.pattern.permute.xlu0 0
        %238 = vperm.xlu0 %237, %v196
        %v239 = vpop.permute.xlu0 %238
        %242 = vset.pattern.permute.xlu0 0
        %243 = vperm.xlu0 %242, %v197
        %v244 = vpop.permute.xlu0 %243
        %247 = vset.pattern.permute.xlu0 0
        %248 = vperm.xlu0 %247, %v198
        %v249 = vpop.permute.xlu0 %248
        %v251 = vlaneseq
        %v252 = vshrl.u32 %v251, 7
        %v253 = vsub.s32 0, %v252
        %v254 = vrot.slane %v199, %v253
        %v255 = vmul.f32 %v204, %v254
        %v256 = vmul.f32 %v209, %v254
        %v257 = vmul.f32 %v214, %v254
        %v258 = vmul.f32 %v219, %v254
        %v259 = vmul.f32 %v224, %v254
        %v260 = vmul.f32 %v229, %v254
        %v261 = vmul.f32 %v234, %v254
        %v262 = vmul.f32 %v239, %v254
        %v263 = vmul.f32 %v244, %v254
        %v264 = vmul.f32 %v249, %v254
        %v265 = vlaneseq
        %v266 = vshrl.u32 %v265, 7
        %v267 = vsub.s32 0, %v266
        %v268 = vrot.slane %v200, %v267
        %v269 = vadd.f32 %v268, %v255
        %v270 = vadd.f32 %v268, %v256
        %v271 = vadd.f32 %v268, %v257
        %v272 = vadd.f32 %v268, %v258
        %v273 = vadd.f32 %v268, %v259
        %v274 = vadd.f32 %v268, %v260
        %v275 = vadd.f32 %v268, %v261
        %v276 = vadd.f32 %v268, %v262
        %v277 = vadd.f32 %v268, %v263
        %v278 = vadd.f32 %v268, %v264
        %279 = vset.pattern.permute.xlu0 1
        %280 = vperm.xlu0 %279, %v189
        %v281 = vpop.permute.xlu0 %280
        %283 = vset.pattern.permute.xlu0 1
        %284 = vperm.xlu0 %283, %v190
        %v285 = vpop.permute.xlu0 %284
        %287 = vset.pattern.permute.xlu0 1
        %288 = vperm.xlu0 %287, %v191
        %v289 = vpop.permute.xlu0 %288
        %291 = vset.pattern.permute.xlu0 1
        %292 = vperm.xlu0 %291, %v192
        %v293 = vpop.permute.xlu0 %292
        %295 = vset.pattern.permute.xlu0 1
        %296 = vperm.xlu0 %295, %v193
        %v297 = vpop.permute.xlu0 %296
        %299 = vset.pattern.permute.xlu0 1
        %300 = vperm.xlu0 %299, %v194
        %v301 = vpop.permute.xlu0 %300
        %303 = vset.pattern.permute.xlu0 1
        %304 = vperm.xlu0 %303, %v195
        %v305 = vpop.permute.xlu0 %304
        %307 = vset.pattern.permute.xlu0 1
        %308 = vperm.xlu0 %307, %v196
        %v309 = vpop.permute.xlu0 %308
        %311 = vset.pattern.permute.xlu0 1
        %312 = vperm.xlu0 %311, %v197
        %v313 = vpop.permute.xlu0 %312
        %315 = vset.pattern.permute.xlu0 1
        %316 = vperm.xlu0 %315, %v198
        %v317 = vpop.permute.xlu0 %316
        %v319 = vlaneseq
        %v320 = vshrl.u32 %v319, 7
        %v321 = vsub.s32 1, %v320
        %v322 = vrot.slane %v199, %v321
        %v323 = vmul.f32 %v281, %v322
        %v324 = vmul.f32 %v285, %v322
        %v325 = vmul.f32 %v289, %v322
        %v326 = vmul.f32 %v293, %v322
        %v327 = vmul.f32 %v297, %v322
        %v328 = vmul.f32 %v301, %v322
        %v329 = vmul.f32 %v305, %v322
        %v330 = vmul.f32 %v309, %v322
        %v331 = vmul.f32 %v313, %v322
        %v332 = vmul.f32 %v317, %v322
        %v333 = vadd.f32 %v269, %v323
        %v334 = vadd.f32 %v270, %v324
        %v335 = vadd.f32 %v271, %v325
        %v336 = vadd.f32 %v272, %v326
        %v337 = vadd.f32 %v273, %v327
        %v338 = vadd.f32 %v274, %v328
        %v339 = vadd.f32 %v275, %v329
        %v340 = vadd.f32 %v276, %v330
        %v341 = vadd.f32 %v277, %v331
        %v342 = vadd.f32 %v278, %v332
        %343 = vset.pattern.permute.xlu0 2
        %344 = vperm.xlu0 %343, %v189
        %v345 = vpop.permute.xlu0 %344
        %347 = vset.pattern.permute.xlu0 2
        %348 = vperm.xlu0 %347, %v190
        %v349 = vpop.permute.xlu0 %348
        %351 = vset.pattern.permute.xlu0 2
        %352 = vperm.xlu0 %351, %v191
        %v353 = vpop.permute.xlu0 %352
        %355 = vset.pattern.permute.xlu0 2
        %356 = vperm.xlu0 %355, %v192
        %v357 = vpop.permute.xlu0 %356
        %359 = vset.pattern.permute.xlu0 2
        %360 = vperm.xlu0 %359, %v193
        %v361 = vpop.permute.xlu0 %360
        %363 = vset.pattern.permute.xlu0 2
        %364 = vperm.xlu0 %363, %v194
        %v365 = vpop.permute.xlu0 %364
        %367 = vset.pattern.permute.xlu0 2
        %368 = vperm.xlu0 %367, %v195
        %v369 = vpop.permute.xlu0 %368
        %371 = vset.pattern.permute.xlu0 2
        %372 = vperm.xlu0 %371, %v196
        %v373 = vpop.permute.xlu0 %372
        %375 = vset.pattern.permute.xlu0 2
        %376 = vperm.xlu0 %375, %v197
        %v377 = vpop.permute.xlu0 %376
        %379 = vset.pattern.permute.xlu0 2
        %380 = vperm.xlu0 %379, %v198
        %v381 = vpop.permute.xlu0 %380
        %v383 = vlaneseq
        %v384 = vshrl.u32 %v383, 7
        %v385 = vsub.s32 2, %v384
        %v386 = vrot.slane %v199, %v385
        %v387 = vmul.f32 %v345, %v386
        %v388 = vmul.f32 %v349, %v386
        %v389 = vmul.f32 %v353, %v386
        %v390 = vmul.f32 %v357, %v386
        %v391 = vmul.f32 %v361, %v386
        %v392 = vmul.f32 %v365, %v386
        %v393 = vmul.f32 %v369, %v386
        %v394 = vmul.f32 %v373, %v386
        %v395 = vmul.f32 %v377, %v386
        %v396 = vmul.f32 %v381, %v386
        %v397 = vadd.f32 %v333, %v387
        %v398 = vadd.f32 %v334, %v388
        %v399 = vadd.f32 %v335, %v389
        %v400 = vadd.f32 %v336, %v390
        %v401 = vadd.f32 %v337, %v391
        %v402 = vadd.f32 %v338, %v392
        %v403 = vadd.f32 %v339, %v393
        %v404 = vadd.f32 %v340, %v394
        %v405 = vadd.f32 %v341, %v395
        %v406 = vadd.f32 %v342, %v396
        %407 = vset.pattern.permute.xlu0 3
        %408 = vperm.xlu0 %407, %v189
        %v409 = vpop.permute.xlu0 %408
        %411 = vset.pattern.permute.xlu0 3
        %412 = vperm.xlu0 %411, %v190
        %v413 = vpop.permute.xlu0 %412
        %415 = vset.pattern.permute.xlu0 3
        %416 = vperm.xlu0 %415, %v191
        %v417 = vpop.permute.xlu0 %416
        %419 = vset.pattern.permute.xlu0 3
        %420 = vperm.xlu0 %419, %v192
        %v421 = vpop.permute.xlu0 %420
        %423 = vset.pattern.permute.xlu0 3
        %424 = vperm.xlu0 %423, %v193
        %v425 = vpop.permute.xlu0 %424
        %427 = vset.pattern.permute.xlu0 3
        %428 = vperm.xlu0 %427, %v194
        %v429 = vpop.permute.xlu0 %428
        %431 = vset.pattern.permute.xlu0 3
        %432 = vperm.xlu0 %431, %v195
        %v433 = vpop.permute.xlu0 %432
        %435 = vset.pattern.permute.xlu0 3
        %436 = vperm.xlu0 %435, %v196
        %v437 = vpop.permute.xlu0 %436
        %439 = vset.pattern.permute.xlu0 3
        %440 = vperm.xlu0 %439, %v197
        %v441 = vpop.permute.xlu0 %440
        %443 = vset.pattern.permute.xlu0 3
        %444 = vperm.xlu0 %443, %v198
        %v445 = vpop.permute.xlu0 %444
        %v447 = vlaneseq
        %v448 = vshrl.u32 %v447, 7
        %v449 = vsub.s32 3, %v448
        %v450 = vrot.slane %v199, %v449
        %v451 = vmul.f32 %v409, %v450
        %v452 = vmul.f32 %v413, %v450
        %v453 = vmul.f32 %v417, %v450
        %v454 = vmul.f32 %v421, %v450
        %v455 = vmul.f32 %v425, %v450
        %v456 = vmul.f32 %v429, %v450
        %v457 = vmul.f32 %v433, %v450
        %v458 = vmul.f32 %v437, %v450
        %v459 = vmul.f32 %v441, %v450
        %v460 = vmul.f32 %v445, %v450
        %v461 = vadd.f32 %v397, %v451
        %v462 = vadd.f32 %v398, %v452
        %v463 = vadd.f32 %v399, %v453
        %v464 = vadd.f32 %v400, %v454
        %v465 = vadd.f32 %v401, %v455
        %v466 = vadd.f32 %v402, %v456
        %v467 = vadd.f32 %v403, %v457
        %v468 = vadd.f32 %v404, %v458
        %v469 = vadd.f32 %v405, %v459
        %v470 = vadd.f32 %v406, %v460
        %v471 = vmax.f32 %v461, 0.0
        %v472 = vmax.f32 %v462, 0.0
        %v473 = vmax.f32 %v463, 0.0
        %v474 = vmax.f32 %v464, 0.0
        %v475 = vmax.f32 %v465, 0.0
        %v476 = vmax.f32 %v466, 0.0
        %v477 = vmax.f32 %v467, 0.0
        %v478 = vmax.f32 %v468, 0.0
        %v479 = vmax.f32 %v469, 0.0
        %v480 = vmax.f32 %v470, 0.0
        %s481 = scalar_lea.vmem [#allocation2], 128
        %v482 = vld [vmem:[%s481] sm:$0xff]
        %v483 = vld [vmem:[%s481 + $0x8] sm:$0xff]
        %v484 = vld [vmem:[%s481 + $0x10] sm:$0xff]
        %v485 = vld [vmem:[%s481 + $0x18] sm:$0xff]
        %v486 = vld [vmem:[%s481 + $0x20] sm:$0xff]
        %v487 = vld [vmem:[%s481 + $0x28] sm:$0xff]
        %v488 = vld [vmem:[%s481 + $0x30] sm:$0xff]
        %v489 = vld [vmem:[%s481 + $0x38] sm:$0xff]
        %v490 = vld [vmem:[%s481 + $0x40] sm:$0xff]
        %v491 = vld [vmem:[%s481 + $0x48] sm:$0xff]
        %v492 = vld [vmem:[%s481 + $0x50] sm:$0xff]
        %v493 = vld [vmem:[%s481 + $0x58] sm:$0xff]
        %v494 = vld [vmem:[%s481 + $0x60] sm:$0xff]
        %v495 = vld [vmem:[%s481 + $0x68] sm:$0xff]
        %v496 = vld [vmem:[%s481 + $0x70] sm:$0xff]
        %v497 = vld [vmem:[%s481 + $0x78] sm:$0xff]
        %v498 = vld [vmem:[%s2 + $0x1] sm:$0x1]
        %v499 = vlaneseq
        %v500 = vshrl.u32 %v499, 7
        %v501 = vsub.s32 0, %v500
        %v502 = vrot.slane %v498, %v501
        %503 = vmatprep.subr.mxu0 0.0
        %504 = vmatpush1.msra.mxu0 %v482
        %505 = vmatprep.subr.mxu0 0.0
        %506 = vmatpush1.msra.mxu0 %v483
        %507 = vmatprep.subr.mxu0 0.0
        %508 = vmatpush1.msra.mxu0 %v484
        %509 = vmatprep.subr.mxu0 0.0
        %510 = vmatpush1.msra.mxu0 %v485
        %511 = vmatprep.subr.mxu0 0.0
        %512 = vmatpush1.msra.mxu0 %v486
        %513 = vmatprep.subr.mxu0 0.0
        %514 = vmatpush1.msra.mxu0 %v487
        %515 = vmatprep.subr.mxu0 0.0
        %516 = vmatpush1.msra.mxu0 %v488
        %517 = vmatprep.subr.mxu0 0.0
        %518 = vmatpush1.msra.mxu0 %v489
        %519 = vmatprep.subr.mxu0 0.0
        %520 = vmatpush1.msra.mxu0 %v490
        %521 = vmatprep.subr.mxu0 0.0
        %522 = vmatpush1.msra.mxu0 %v491
        %523 = vmatprep.subr.mxu0 0.0
        %524 = vmatpush1.msra.mxu0 %v492
        %525 = vmatprep.subr.mxu0 0.0
        %526 = vmatpush1.msra.mxu0 %v493
        %527 = vmatprep.subr.mxu0 0.0
        %528 = vmatpush1.msra.mxu0 %v494
        %529 = vmatprep.subr.mxu0 0.0
        %530 = vmatpush1.msra.mxu0 %v495
        %531 = vmatprep.subr.mxu0 0.0
        %532 = vmatpush1.msra.mxu0 %v496
        %533 = vmatprep.subr.mxu0 0.0
        %534 = vmatpush1.msra.mxu0 %v497
        %535 = vmatprep.subr.mxu0 0.0
        %536 = vmatpush1.msra.mxu0 0.0
        %537 = vmatprep.subr.mxu0 0.0
        %538 = vmatpush1.msra.mxu0 0.0
        %539 = vmatprep.subr.mxu0 0.0
        %540 = vmatpush1.msra.mxu0 0.0
        %541 = vmatprep.subr.mxu0 0.0
        %542 = vmatpush1.msra.mxu0 0.0
        %543 = vmatprep.subr.mxu0 0.0
        %544 = vmatpush1.msra.mxu0 0.0
        %545 = vmatprep.subr.mxu0 0.0
        %546 = vmatpush1.msra.mxu0 0.0
        %547 = vmatprep.subr.mxu0 0.0
        %548 = vmatpush1.msra.mxu0 0.0
        %549 = vmatprep.subr.mxu0 0.0
        %550 = vmatpush1.msra.mxu0 0.0
        %551 = vmatprep.subr.mxu0 0.0
        %552 = vmatpush1.msra.mxu0 0.0
        %553 = vmatprep.subr.mxu0 0.0
        %554 = vmatpush1.msra.mxu0 0.0
        %555 = vmatprep.subr.mxu0 0.0
        %556 = vmatpush1.msra.mxu0 0.0
        %557 = vmatprep.subr.mxu0 0.0
        %558 = vmatpush1.msra.mxu0 0.0
        %559 = vmatprep.subr.mxu0 0.0
        %560 = vmatpush1.msra.mxu0 0.0
        %561 = vmatprep.subr.mxu0 0.0
        %562 = vmatpush1.msra.mxu0 0.0
        %563 = vmatprep.subr.mxu0 0.0
        %564 = vmatpush1.msra.mxu0 0.0
        %565 = vmatprep.subr.mxu0 0.0
        %566 = vmatpush1.msra.mxu0 0.0
        %567 = vmatprep.mubr.f32.mxu0 0.0
        %568 = vmatmul.mubr.f32.gmra.mrb[0].mxu0 %v471
        %v569 = vpop.f32.mrb[0].mxu0
        %v570 = vadd.f32 %v502, %v569
        %v571 = vpop.f32.mrb[0].mxu0
        %572 = vmatprep.mubr.f32.mxu0 0.0
        %573 = vmatmul.mubr.f32.gmra.mrb[0].mxu0 %v472
        %v574 = vpop.f32.mrb[0].mxu0
        %v575 = vadd.f32 %v502, %v574
        %v576 = vpop.f32.mrb[0].mxu0
        %577 = vmatprep.mubr.f32.mxu0 0.0
        %578 = vmatmul.mubr.f32.gmra.mrb[0].mxu0 %v473
        %v579 = vpop.f32.mrb[0].mxu0
        %v580 = vadd.f32 %v502, %v579
        %v581 = vpop.f32.mrb[0].mxu0
        %582 = vmatprep.mubr.f32.mxu0 0.0
        %583 = vmatmul.mubr.f32.gmra.mrb[0].mxu0 %v474
        %v584 = vpop.f32.mrb[0].mxu0
        %v585 = vadd.f32 %v502, %v584
        %v586 = vpop.f32.mrb[0].mxu0
        %587 = vmatprep.mubr.f32.mxu0 0.0
        %588 = vmatmul.mubr.f32.gmra.mrb[0].mxu0 %v475
        %v589 = vpop.f32.mrb[0].mxu0
        %v590 = vadd.f32 %v502, %v589
        %v591 = vpop.f32.mrb[0].mxu0
        %592 = vmatprep.mubr.f32.mxu0 0.0
        %593 = vmatmul.mubr.f32.gmra.mrb[0].mxu0 %v476
        %v594 = vpop.f32.mrb[0].mxu0
        %v595 = vadd.f32 %v502, %v594
        %v596 = vpop.f32.mrb[0].mxu0
        %597 = vmatprep.mubr.f32.mxu0 0.0
        %598 = vmatmul.mubr.f32.gmra.mrb[0].mxu0 %v477
        %v599 = vpop.f32.mrb[0].mxu0
        %v600 = vadd.f32 %v502, %v599
        %v601 = vpop.f32.mrb[0].mxu0
        %602 = vmatprep.mubr.f32.mxu0 0.0
        %603 = vmatmul.mubr.f32.gmra.mrb[0].mxu0 %v478
        %v604 = vpop.f32.mrb[0].mxu0
        %v605 = vadd.f32 %v502, %v604
        %v606 = vpop.f32.mrb[0].mxu0
        %607 = vmatprep.mubr.f32.mxu0 0.0
        %608 = vmatmul.mubr.f32.gmra.mrb[0].mxu0 %v479
        %v609 = vpop.f32.mrb[0].mxu0
        %v610 = vadd.f32 %v502, %v609
        %v611 = vpop.f32.mrb[0].mxu0
        %612 = vmatprep.mubr.f32.mxu0 0.0
        %613 = vmatmul.mubr.f32.gmra.mrb[0].mxu0 %v480
        %v614 = vpop.f32.mrb[0].mxu0
        %v615 = vadd.f32 %v502, %v614
        %v616 = vpop.f32.mrb[0].mxu0
        %617 = vdwg.mxu0
        %v618 = vmax.f32 %v570, 0.0
        %v619 = vmax.f32 %v575, 0.0
        %v620 = vmax.f32 %v580, 0.0
        %v621 = vmax.f32 %v585, 0.0
        %v622 = vmax.f32 %v590, 0.0
        %v623 = vmax.f32 %v595, 0.0
        %v624 = vmax.f32 %v600, 0.0
        %v625 = vmax.f32 %v605, 0.0
        %v626 = vmax.f32 %v610, 0.0
        %v627 = vmax.f32 %v615, 0.0
        %s628 = scalar_lea.vmem [#allocation2], 256
        %v629 = vld [vmem:[%s628] sm:$0xff]
        %v630 = vld [vmem:[%s628 + $0x8] sm:$0xff]
        %v631 = vld [vmem:[%s628 + $0x10] sm:$0xff]
        %v632 = vld [vmem:[%s628 + $0x18] sm:$0xff]
        %v633 = vld [vmem:[%s628 + $0x20] sm:$0xff]
        %v634 = vld [vmem:[%s628 + $0x28] sm:$0xff]
        %v635 = vld [vmem:[%s628 + $0x30] sm:$0xff]
        %v636 = vld [vmem:[%s628 + $0x38] sm:$0xff]
        %v637 = vld [vmem:[%s628 + $0x40] sm:$0xff]
        %v638 = vld [vmem:[%s628 + $0x48] sm:$0xff]
        %v639 = vld [vmem:[%s628 + $0x50] sm:$0xff]
        %v640 = vld [vmem:[%s628 + $0x58] sm:$0xff]
        %v641 = vld [vmem:[%s628 + $0x60] sm:$0xff]
        %v642 = vld [vmem:[%s628 + $0x68] sm:$0xff]
        %v643 = vld [vmem:[%s628 + $0x70] sm:$0xff]
        %v644 = vld [vmem:[%s628 + $0x78] sm:$0xff]
        %v645 = vld [vmem:[%s2 + $0x2] sm:$0x1]
        %v646 = vlaneseq
        %v647 = vshrl.u32 %v646, 7
        %v648 = vsub.s32 0, %v647
        %v649 = vrot.slane %v645, %v648
        %650 = vmatprep.subr.mxu0 0.0
        %651 = vmatpush1.msra.mxu0 %v629
        %652 = vmatprep.subr.mxu0 0.0
        %653 = vmatpush1.msra.mxu0 %v630
        %654 = vmatprep.subr.mxu0 0.0
        %655 = vmatpush1.msra.mxu0 %v631
        %656 = vmatprep.subr.mxu0 0.0
        %657 = vmatpush1.msra.mxu0 %v632
        %658 = vmatprep.subr.mxu0 0.0
        %659 = vmatpush1.msra.mxu0 %v633
        %660 = vmatprep.subr.mxu0 0.0
        %661 = vmatpush1.msra.mxu0 %v634
        %662 = vmatprep.subr.mxu0 0.0
        %663 = vmatpush1.msra.mxu0 %v635
        %664 = vmatprep.subr.mxu0 0.0
        %665 = vmatpush1.msra.mxu0 %v636
        %666 = vmatprep.subr.mxu0 0.0
        %667 = vmatpush1.msra.mxu0 %v637
        %668 = vmatprep.subr.mxu0 0.0
        %669 = vmatpush1.msra.mxu0 %v638
        %670 = vmatprep.subr.mxu0 0.0
        %671 = vmatpush1.msra.mxu0 %v639
        %672 = vmatprep.subr.mxu0 0.0
        %673 = vmatpush1.msra.mxu0 %v640
        %674 = vmatprep.subr.mxu0 0.0
        %675 = vmatpush1.msra.mxu0 %v641
        %676 = vmatprep.subr.mxu0 0.0
        %677 = vmatpush1.msra.mxu0 %v642
        %678 = vmatprep.subr.mxu0 0.0
        %679 = vmatpush1.msra.mxu0 %v643
        %680 = vmatprep.subr.mxu0 0.0
        %681 = vmatpush1.msra.mxu0 %v644
        %682 = vmatprep.subr.mxu0 0.0
        %683 = vmatpush1.msra.mxu0 0.0
        %684 = vmatprep.subr.mxu0 0.0
        %685 = vmatpush1.msra.mxu0 0.0
        %686 = vmatprep.subr.mxu0 0.0
        %687 = vmatpush1.msra.mxu0 0.0
        %688 = vmatprep.subr.mxu0 0.0
        %689 = vmatpush1.msra.mxu0 0.0
        %690 = vmatprep.subr.mxu0 0.0
        %691 = vmatpush1.msra.mxu0 0.0
        %692 = vmatprep.subr.mxu0 0.0
        %693 = vmatpush1.msra.mxu0 0.0
        %694 = vmatprep.subr.mxu0 0.0
        %695 = vmatpush1.msra.mxu0 0.0
        %696 = vmatprep.subr.mxu0 0.0
        %697 = vmatpush1.msra.mxu0 0.0
        %698 = vmatprep.subr.mxu0 0.0
        %699 = vmatpush1.msra.mxu0 0.0
        %700 = vmatprep.subr.mxu0 0.0
        %701 = vmatpush1.msra.mxu0 0.0
        %702 = vmatprep.subr.mxu0 0.0
        %703 = vmatpush1.msra.mxu0 0.0
        %704 = vmatprep.subr.mxu0 0.0
        %705 = vmatpush1.msra.mxu0 0.0
        %706 = vmatprep.subr.mxu0 0.0
        %707 = vmatpush1.msra.mxu0 0.0
        %708 = vmatprep.subr.mxu0 0.0
        %709 = vmatpush1.msra.mxu0 0.0
        %710 = vmatprep.subr.mxu0 0.0
        %711 = vmatpush1.msra.mxu0 0.0
        %712 = vmatprep.subr.mxu0 0.0
        %713 = vmatpush1.msra.mxu0 0.0
        %714 = vmatprep.mubr.f32.mxu0 0.0
        %715 = vmatmul.mubr.f32.gmra.mrb[0].mxu0 %v618
        %v716 = vpop.f32.mrb[0].mxu0
        %v717 = vadd.f32 %v649, %v716
        %v718 = vpop.f32.mrb[0].mxu0
        %719 = vmatprep.mubr.f32.mxu0 0.0
        %720 = vmatmul.mubr.f32.gmra.mrb[0].mxu0 %v619
        %v721 = vpop.f32.mrb[0].mxu0
        %v722 = vadd.f32 %v649, %v721
        %v723 = vpop.f32.mrb[0].mxu0
        %724 = vmatprep.mubr.f32.mxu0 0.0
        %725 = vmatmul.mubr.f32.gmra.mrb[0].mxu0 %v620
        %v726 = vpop.f32.mrb[0].mxu0
        %v727 = vadd.f32 %v649, %v726
        %v728 = vpop.f32.mrb[0].mxu0
        %729 = vmatprep.mubr.f32.mxu0 0.0
        %730 = vmatmul.mubr.f32.gmra.mrb[0].mxu0 %v621
        %v731 = vpop.f32.mrb[0].mxu0
        %v732 = vadd.f32 %v649, %v731
        %v733 = vpop.f32.mrb[0].mxu0
        %734 = vmatprep.mubr.f32.mxu0 0.0
        %735 = vmatmul.mubr.f32.gmra.mrb[0].mxu0 %v622
        %v736 = vpop.f32.mrb[0].mxu0
        %v737 = vadd.f32 %v649, %v736
        %v738 = vpop.f32.mrb[0].mxu0
        %739 = vmatprep.mubr.f32.mxu0 0.0
        %740 = vmatmul.mubr.f32.gmra.mrb[0].mxu0 %v623
        %v741 = vpop.f32.mrb[0].mxu0
        %v742 = vadd.f32 %v649, %v741
        %v743 = vpop.f32.mrb[0].mxu0
        %744 = vmatprep.mubr.f32.mxu0 0.0
        %745 = vmatmul.mubr.f32.gmra.mrb[0].mxu0 %v624
        %v746 = vpop.f32.mrb[0].mxu0
        %v747 = vadd.f32 %v649, %v746
        %v748 = vpop.f32.mrb[0].mxu0
        %749 = vmatprep.mubr.f32.mxu0 0.0
        %750 = vmatmul.mubr.f32.gmra.mrb[0].mxu0 %v625
        %v751 = vpop.f32.mrb[0].mxu0
        %v752 = vadd.f32 %v649, %v751
        %v753 = vpop.f32.mrb[0].mxu0
        %754 = vmatprep.mubr.f32.mxu0 0.0
        %755 = vmatmul.mubr.f32.gmra.mrb[0].mxu0 %v626
        %v756 = vpop.f32.mrb[0].mxu0
        %v757 = vadd.f32 %v649, %v756
        %v758 = vpop.f32.mrb[0].mxu0
        %759 = vmatprep.mubr.f32.mxu0 0.0
        %760 = vmatmul.mubr.f32.gmra.mrb[0].mxu0 %v627
        %v761 = vpop.f32.mrb[0].mxu0
        %v762 = vadd.f32 %v649, %v761
        %v763 = vpop.f32.mrb[0].mxu0
        %764 = vdwg.mxu0
        %v765 = vmax.f32 %v717, 0.0
        %v766 = vmax.f32 %v722, 0.0
        %v767 = vmax.f32 %v727, 0.0
        %v768 = vmax.f32 %v732, 0.0
        %v769 = vmax.f32 %v737, 0.0
        %v770 = vmax.f32 %v742, 0.0
        %v771 = vmax.f32 %v747, 0.0
        %v772 = vmax.f32 %v752, 0.0
        %v773 = vmax.f32 %v757, 0.0
        %v774 = vmax.f32 %v762, 0.0
        %s775 = scalar_lea.vmem [#allocation2], 384
        %v776 = vld [vmem:[%s775] sm:$0xff]
        %v777 = vld [vmem:[%s775 + $0x8] sm:$0xff]
        %v778 = vld [vmem:[%s775 + $0x10] sm:$0xff]
        %v779 = vld [vmem:[%s775 + $0x18] sm:$0xff]
        %v780 = vld [vmem:[%s775 + $0x20] sm:$0xff]
        %v781 = vld [vmem:[%s775 + $0x28] sm:$0xff]
        %v782 = vld [vmem:[%s775 + $0x30] sm:$0xff]
        %v783 = vld [vmem:[%s775 + $0x38] sm:$0xff]
        %v784 = vld [vmem:[%s775 + $0x40] sm:$0xff]
        %v785 = vld [vmem:[%s775 + $0x48] sm:$0xff]
        %v786 = vld [vmem:[%s775 + $0x50] sm:$0xff]
        %v787 = vld [vmem:[%s775 + $0x58] sm:$0xff]
        %v788 = vld [vmem:[%s775 + $0x60] sm:$0xff]
        %v789 = vld [vmem:[%s775 + $0x68] sm:$0xff]
        %v790 = vld [vmem:[%s775 + $0x70] sm:$0xff]
        %v791 = vld [vmem:[%s775 + $0x78] sm:$0xff]
        %v792 = vld [vmem:[%s2 + $0x3] sm:$0x1]
        %v793 = vlaneseq
        %v794 = vshrl.u32 %v793, 7
        %v795 = vsub.s32 0, %v794
        %v796 = vrot.slane %v792, %v795
        %797 = vmatprep.subr.mxu0 0.0
        %798 = vmatpush1.msra.mxu0 %v776
        %799 = vmatprep.subr.mxu0 0.0
        %800 = vmatpush1.msra.mxu0 %v777
        %801 = vmatprep.subr.mxu0 0.0
        %802 = vmatpush1.msra.mxu0 %v778
        %803 = vmatprep.subr.mxu0 0.0
        %804 = vmatpush1.msra.mxu0 %v779
        %805 = vmatprep.subr.mxu0 0.0
        %806 = vmatpush1.msra.mxu0 %v780
        %807 = vmatprep.subr.mxu0 0.0
        %808 = vmatpush1.msra.mxu0 %v781
        %809 = vmatprep.subr.mxu0 0.0
        %810 = vmatpush1.msra.mxu0 %v782
        %811 = vmatprep.subr.mxu0 0.0
        %812 = vmatpush1.msra.mxu0 %v783
        %813 = vmatprep.subr.mxu0 0.0
        %814 = vmatpush1.msra.mxu0 %v784
        %815 = vmatprep.subr.mxu0 0.0
        %816 = vmatpush1.msra.mxu0 %v785
        %817 = vmatprep.subr.mxu0 0.0
        %818 = vmatpush1.msra.mxu0 %v786
        %819 = vmatprep.subr.mxu0 0.0
        %820 = vmatpush1.msra.mxu0 %v787
        %821 = vmatprep.subr.mxu0 0.0
        %822 = vmatpush1.msra.mxu0 %v788
        %823 = vmatprep.subr.mxu0 0.0
        %824 = vmatpush1.msra.mxu0 %v789
        %825 = vmatprep.subr.mxu0 0.0
        %826 = vmatpush1.msra.mxu0 %v790
        %827 = vmatprep.subr.mxu0 0.0
        %828 = vmatpush1.msra.mxu0 %v791
        %829 = vmatprep.subr.mxu0 0.0
        %830 = vmatpush1.msra.mxu0 0.0
        %831 = vmatprep.subr.mxu0 0.0
        %832 = vmatpush1.msra.mxu0 0.0
        %833 = vmatprep.subr.mxu0 0.0
        %834 = vmatpush1.msra.mxu0 0.0
        %835 = vmatprep.subr.mxu0 0.0
        %836 = vmatpush1.msra.mxu0 0.0
        %837 = vmatprep.subr.mxu0 0.0
        %838 = vmatpush1.msra.mxu0 0.0
        %839 = vmatprep.subr.mxu0 0.0
        %840 = vmatpush1.msra.mxu0 0.0
        %841 = vmatprep.subr.mxu0 0.0
        %842 = vmatpush1.msra.mxu0 0.0
        %843 = vmatprep.subr.mxu0 0.0
        %844 = vmatpush1.msra.mxu0 0.0
        %845 = vmatprep.subr.mxu0 0.0
        %846 = vmatpush1.msra.mxu0 0.0
        %847 = vmatprep.subr.mxu0 0.0
        %848 = vmatpush1.msra.mxu0 0.0
        %849 = vmatprep.subr.mxu0 0.0
        %850 = vmatpush1.msra.mxu0 0.0
        %851 = vmatprep.subr.mxu0 0.0
        %852 = vmatpush1.msra.mxu0 0.0
        %853 = vmatprep.subr.mxu0 0.0
        %854 = vmatpush1.msra.mxu0 0.0
        %855 = vmatprep.subr.mxu0 0.0
        %856 = vmatpush1.msra.mxu0 0.0
        %857 = vmatprep.subr.mxu0 0.0
        %858 = vmatpush1.msra.mxu0 0.0
        %859 = vmatprep.subr.mxu0 0.0
        %860 = vmatpush1.msra.mxu0 0.0
        %861 = vmatprep.mubr.f32.mxu0 0.0
        %862 = vmatmul.mubr.f32.gmra.mrb[0].mxu0 %v765
        %v863 = vpop.f32.mrb[0].mxu0
        %v864 = vadd.f32 %v796, %v863
        %v865 = vpop.f32.mrb[0].mxu0
        %866 = vmatprep.mubr.f32.mxu0 0.0
        %867 = vmatmul.mubr.f32.gmra.mrb[0].mxu0 %v766
        %v868 = vpop.f32.mrb[0].mxu0
        %v869 = vadd.f32 %v796, %v868
        %v870 = vpop.f32.mrb[0].mxu0
        %871 = vmatprep.mubr.f32.mxu0 0.0
        %872 = vmatmul.mubr.f32.gmra.mrb[0].mxu0 %v767
        %v873 = vpop.f32.mrb[0].mxu0
        %v874 = vadd.f32 %v796, %v873
        %v875 = vpop.f32.mrb[0].mxu0
        %876 = vmatprep.mubr.f32.mxu0 0.0
        %877 = vmatmul.mubr.f32.gmra.mrb[0].mxu0 %v768
        %v878 = vpop.f32.mrb[0].mxu0
        %v879 = vadd.f32 %v796, %v878
        %v880 = vpop.f32.mrb[0].mxu0
        %881 = vmatprep.mubr.f32.mxu0 0.0
        %882 = vmatmul.mubr.f32.gmra.mrb[0].mxu0 %v769
        %v883 = vpop.f32.mrb[0].mxu0
        %v884 = vadd.f32 %v796, %v883
        %v885 = vpop.f32.mrb[0].mxu0
        %886 = vmatprep.mubr.f32.mxu0 0.0
        %887 = vmatmul.mubr.f32.gmra.mrb[0].mxu0 %v770
        %v888 = vpop.f32.mrb[0].mxu0
        %v889 = vadd.f32 %v796, %v888
        %v890 = vpop.f32.mrb[0].mxu0
        %891 = vmatprep.mubr.f32.mxu0 0.0
        %892 = vmatmul.mubr.f32.gmra.mrb[0].mxu0 %v771
        %v893 = vpop.f32.mrb[0].mxu0
        %v894 = vadd.f32 %v796, %v893
        %v895 = vpop.f32.mrb[0].mxu0
        %896 = vmatprep.mubr.f32.mxu0 0.0
        %897 = vmatmul.mubr.f32.gmra.mrb[0].mxu0 %v772
        %v898 = vpop.f32.mrb[0].mxu0
        %v899 = vadd.f32 %v796, %v898
        %v900 = vpop.f32.mrb[0].mxu0
        %901 = vmatprep.mubr.f32.mxu0 0.0
        %902 = vmatmul.mubr.f32.gmra.mrb[0].mxu0 %v773
        %v903 = vpop.f32.mrb[0].mxu0
        %v904 = vadd.f32 %v796, %v903
        %v905 = vpop.f32.mrb[0].mxu0
        %906 = vmatprep.mubr.f32.mxu0 0.0
        %907 = vmatmul.mubr.f32.gmra.mrb[0].mxu0 %v774
        %v908 = vpop.f32.mrb[0].mxu0
        %v909 = vadd.f32 %v796, %v908
        %v910 = vpop.f32.mrb[0].mxu0
        %911 = vdwg.mxu0
        %912 = vst [vmem:[%s187] sm:$0xff] %v864
        %913 = vst [vmem:[%s187 + $0x8] sm:$0xff] %v869
        %914 = vst [vmem:[%s187 + $0x10] sm:$0xff] %v874
        %915 = vst [vmem:[%s187 + $0x18] sm:$0xff] %v879
        %916 = vst [vmem:[%s187 + $0x20] sm:$0xff] %v884
        %917 = vst [vmem:[%s187 + $0x28] sm:$0xff] %v889
        %918 = vst [vmem:[%s187 + $0x30] sm:$0xff] %v894
        %919 = vst [vmem:[%s187 + $0x38] sm:$0xff] %v899
        %920 = vst [vmem:[%s187 + $0x40] sm:$0xff] %v904
        %921 = vst [vmem:[%s187 + $0x48] sm:$0xff] %v909
        %s922 = smul.u32 10, %s15
        %p923 = scmp.lt.s32.totalorder %s922, 19
        %s924 = scalar_select %p923, %s922, 19
        %s925 = smul.addr %s924, 8
        %s926 = scalar_lea.vmem %s3, %s925
        // Predicated region
        $region37: #{iris_classifier_forward.1} parent=31 // pred_check
          %p927 = pneg %p101
        $region38: #{iris_classifier_forward.1} parent=31 // pred_check_branch
          %929 = sbr.rel (%p927) target = $region40
        $region39: #{iris_classifier_forward.1} parent=31 // pred_region
          %s930 = smul.u32 10, %s15
        $region40: #{iris_classifier_forward.1} parent=31 // pred_fallthru
          _
      $region32: #{iris_classifier_forward.1} parent=5 // pred_fallthru
        _
      %p931 = scmp.le.s32.totalorder 2, %s10
      // Predicated region
      $region41: #{iris_classifier_forward.1} parent=5 // pred_check
        %p932 = pneg %p931
      $region42: #{iris_classifier_forward.1} parent=5 // pred_check_branch
        %934 = sbr.rel (%p932) target = $region44
      $region43: #{iris_classifier_forward.1} parent=5 // pred_region
        %s935 = ssub.s32 %s10, 2
        // Predicated region
        $region45: #{iris_classifier_forward.1} parent=43 // pred_check
          %p936 = pneg %p107
        $region46: #{iris_classifier_forward.1} parent=43 // pred_check_branch
          %938 = sbr.rel (%p936) target = $region48
        $region47: #{iris_classifier_forward.1} parent=43 // pred_region
          %s939 = smul.u32 10, %s16
          %p940 = scmp.lt.s32.totalorder %s939, 19
          %s941 = scalar_select %p940, %s939, 19
          %s942 = smul.addr %s941, 8
          %s943 = scalar_lea.vmem %s3, %s942
        $region48: #{iris_classifier_forward.1} parent=43 // pred_fallthru
          _
      $region44: #{iris_classifier_forward.1} parent=5 // pred_fallthru
        _
    $region6: #{iris_classifier_forward.1} parent=1 // loop_footer
      %s14 = sadd.s32 1, %s10
    $region7: #{iris_classifier_forward.1} parent=1 // loop_footer_branch
      %9 = sbr.rel target = $region3
    $region8: #{iris_classifier_forward.1} parent=1 // loop_exit
      _
    %944 = vsyncpa [#allocation3], 1
    %s945 = scalar_lea.sflag [#allocation3], 1
    %946 = vsyncpa %s945, 1

</llo_original>
